<compile_context>
chip_gen: v7x
topology: tpu7x:2x2x1
jax: 0.10.0
libtpu: 0.0.40
codegen_flags: <defaults>
</compile_context>

<pallas_src>
import jax
import jax.numpy as jnp
from jax.experimental import pallas as pl
from jax.experimental.pallas import tpu as pltpu


def _round_up(x, m):
    return (x + m - 1) // m * m


def victim_matmul_kernel(x_ref, w_ref, b_ref, o_ref):
    # x_ref: (tm, tk) bf16    w_ref: (tk, tn) bf16
    # b_ref: (1, tn)  f32     o_ref: (tm, tn) f32  (k-invariant block -> accumulator)
    # NOTE: correctness relies on K being the innermost ("arbitrary") grid axis
    # and the output BlockSpec index map being k-invariant. Do not reorder.
    k = pl.program_id(2)

    @pl.when(k == 0)
    def _():
        # Initialize the resident output block with the (folded) bias.
        o_ref[...] = jnp.broadcast_to(b_ref[...], o_ref.shape)

    o_ref[...] += jnp.dot(x_ref[...], w_ref[...],
                          preferred_element_type=jnp.float32)


def make_victim_forward(mean_c, std_c, w, b, image_shape,
                        *, tm_cap=256, tn_cap=256, tk_cap=2048):
    """One-time prep (fold + pad of parameters); returns a jitted forward fn."""
    C, H, W_sp = image_shape
    F = C * H * W_sp
    num_classes = w.shape[1]

    # ---- fold per-channel normalization (x - mean) / std into W, b (f32) ----
    inv_std_f = jnp.repeat(1.0 / std_c.astype(jnp.float32), H * W_sp)   # (F,)
    mean_f = jnp.repeat(mean_c.astype(jnp.float32), H * W_sp)           # (F,)
    w_f32 = w.astype(jnp.float32)
    w_fold = w_f32 * inv_std_f[:, None]                                 # (F, N)
    b_fold = b.astype(jnp.float32) - (mean_f * inv_std_f) @ w_f32       # (N,)

    # ---- static tiling along N (lane-dense output) and K ----
    N_pad = _round_up(num_classes, 128)
    tn = min(N_pad, tn_cap)
    F_pad = _round_up(F, 128)
    tk = F_pad if F_pad <= tk_cap else tk_cap
    F_pad = _round_up(F_pad, tk)

    # ---- pad folded parameters ONCE; these arrays are reused on every call ----
    w_p = jnp.zeros((F_pad, N_pad), jnp.bfloat16)
    w_p = w_p.at[:F, :num_classes].set(w_fold.astype(jnp.bfloat16))
    b_p = jnp.zeros((1, N_pad), jnp.float32)
    b_p = b_p.at[0, :num_classes].set(b_fold)

    def forward(x_nchw):
        B = x_nchw.shape[0]
        # bf16 packs 16 sublanes per vreg -> pad batch to 16; cap tm so VMEM
        # stays bounded and the M axis can split across TensorCores (v7x).
        B_pad = _round_up(B, 16)
        tm = min(B_pad, tm_cap)
        B_pad = _round_up(B_pad, tm)

        # Cast straight to bf16 (no f32 intermediate), single pad if needed.
        x_flat = x_nchw.reshape(B, F).astype(jnp.bfloat16)
        if B_pad != B or F_pad != F:
            x_flat = jnp.pad(x_flat, ((0, B_pad - B), (0, F_pad - F)))

        grid = (B_pad // tm, N_pad // tn, F_pad // tk)

        out_p = pl.pallas_call(
            victim_matmul_kernel,
            out_shape=jax.ShapeDtypeStruct((B_pad, N_pad), jnp.float32),
            grid=grid,
            in_specs=[
                pl.BlockSpec((tm, tk), lambda i, j, k: (i, k)),
                pl.BlockSpec((tk, tn), lambda i, j, k: (k, j)),
                pl.BlockSpec((1, tn), lambda i, j, k: (0, j)),
            ],
            out_specs=pl.BlockSpec((tm, tn), lambda i, j, k: (i, j)),
            compiler_params=pltpu.CompilerParams(
                dimension_semantics=("parallel", "parallel", "arbitrary"),
            ),
        )(x_flat, w_p, b_p)

        return out_p[:B, :num_classes]

    return jax.jit(forward)


if __name__ == "__main__":
    # Small shapes consistent with the module's forward: NCHW image batch.
    B, C, H, W = 2, 4, 16, 16
    NUM_CLASSES = 10
    F = C * H * W

    key = jax.random.PRNGKey(0)
    k_x, k_w, k_b = jax.random.split(key, 3)

    x = jax.random.normal(k_x, (B, C, H, W), dtype=jnp.float32)

    # Deterministic "input_transform" parameters (per-channel normalization).
    mean_c = jnp.array([0.485, 0.456, 0.406, 0.500], dtype=jnp.float32)
    std_c = jnp.array([0.229, 0.224, 0.225, 0.250], dtype=jnp.float32)

    # Deterministic "model" parameters (linear classifier).
    w = jax.random.normal(k_w, (F, NUM_CLASSES), dtype=jnp.float32) * 0.02
    b = jax.random.normal(k_b, (NUM_CLASSES,), dtype=jnp.float32) * 0.01

    victim_forward = make_victim_forward(mean_c, std_c, w, b, (C, H, W))
    out = victim_forward(x)
    out = jax.block_until_ready(out)
    assert out.shape == (B, NUM_CLASSES)

    # Reference 1: exactly what the kernel computes (folded weights, bf16
    # inputs, f32 accumulation) -> tight tolerance.
    inv_std_f = jnp.repeat(1.0 / std_c, H * W)
    mean_f = jnp.repeat(mean_c, H * W)
    w_fold = w * inv_std_f[:, None]
    b_fold = b - (mean_f * inv_std_f) @ w
    x_flat = x.reshape(B, F)
    ref_q = (x_flat.astype(jnp.bfloat16).astype(jnp.float32)
             @ w_fold.astype(jnp.bfloat16).astype(jnp.float32)) + b_fold
    assert jnp.allclose(out, ref_q, atol=1e-3, rtol=1e-3), \
        "mismatch vs quantized (bf16-path) reference"

    # Reference 2: the original Victim module semantics in pure f32
    # (normalize -> flatten -> linear) -> loose tolerance for the bf16 stream.
    x_norm_ref = (x - mean_c[None, :, None, None]) / std_c[None, :, None, None]
    ref = x_norm_ref.reshape(B, F) @ w + b[None, :]
    assert jnp.allclose(out, ref, atol=5e-2, rtol=5e-2), \
        "mismatch vs f32 module reference"

    print("KERNEL_OK")
</pallas_src>

<mosaic_0001>
module attributes {stable_mosaic.version = 11 : i64} {
  func.func @victim_matmul_kernel(%arg0: i32, %arg1: i32, %arg2: i32, %arg3: memref<16x1024xbf16, #tpu.memory_space<vmem>>, %arg4: memref<1024x128xbf16, #tpu.memory_space<vmem>>, %arg5: memref<1x128xf32, #tpu.memory_space<vmem>>, %arg6: memref<16x128xf32, #tpu.memory_space<vmem>>) attributes {dimension_semantics = [#tpu.dimension_semantics<parallel>, #tpu.dimension_semantics<parallel>, #tpu.dimension_semantics<arbitrary>], iteration_bounds = array<i64: 1, 1, 1>, scalar_prefetch = 0 : i64, scratch_operands = 0 : i64, tpu.core_type = #tpu.core_type<tc>, window_params = [{transform_indices = @transform_0, window_bounds = array<i64: 16, 1024>}, {transform_indices = @transform_1, window_bounds = array<i64: 1024, 128>}, {transform_indices = @transform_2, window_bounds = array<i64: 1, 128>}, {transform_indices = @transform_3, window_bounds = array<i64: 16, 128>}]} {
    %c0_i32 = arith.constant 0 : i32
    %0 = arith.cmpi eq, %arg2, %c0_i32 : i32
    %1 = arith.extui %0 : i1 to i32
    %c0_i32_0 = arith.constant 0 : i32
    %2 = arith.cmpi ne, %1, %c0_i32_0 : i32
    scf.if %2 {
      %c0_8 = arith.constant 0 : index
      %c0_9 = arith.constant 0 : index
      %9 = vector.load %arg5[%c0_8, %c0_9] : memref<1x128xf32, #tpu.memory_space<vmem>>, vector<1x128xf32>
      %10 = vector.shape_cast %9 : vector<1x128xf32> to vector<1x128xf32>
      %11 = vector.broadcast %10 : vector<1x128xf32> to vector<16x128xf32>
      %c0_10 = arith.constant 0 : index
      %c0_11 = arith.constant 0 : index
      %12 = vector.load %arg6[%c0_10, %c0_11] : memref<16x128xf32, #tpu.memory_space<vmem>>, vector<16x128xf32>
      tpu.vector_store %arg6[%c0_10, %c0_11], %11 {strides = array<i32>} : memref<16x128xf32, #tpu.memory_space<vmem>>, vector<16x128xf32>,
    } else {
    }
    %c0 = arith.constant 0 : index
    %c0_1 = arith.constant 0 : index
    %3 = vector.load %arg6[%c0, %c0_1] : memref<16x128xf32, #tpu.memory_space<vmem>>, vector<16x128xf32>
    %c0_2 = arith.constant 0 : index
    %c0_3 = arith.constant 0 : index
    %4 = vector.load %arg3[%c0_2, %c0_3] : memref<16x1024xbf16, #tpu.memory_space<vmem>>, vector<16x1024xbf16>
    %c0_4 = arith.constant 0 : index
    %c0_5 = arith.constant 0 : index
    %5 = vector.load %arg4[%c0_4, %c0_5] : memref<1024x128xbf16, #tpu.memory_space<vmem>>, vector<1024x128xbf16>
    %cst = arith.constant dense<0.000000e+00> : vector<16x128xf32>
    %6 = tpu.matmul %4, %5, %cst {dimension_numbers = #tpu.dot_dimension_numbers<[1], [0], [0], [1], [0, 0, 1, 1], [], []>} : vector<16x1024xbf16>, vector<1024x128xbf16>, vector<16x128xf32> -> vector<16x128xf32>
    %7 = arith.addf %3, %6 : vector<16x128xf32>
    %c0_6 = arith.constant 0 : index
    %c0_7 = arith.constant 0 : index
    %8 = vector.load %arg6[%c0_6, %c0_7] : memref<16x128xf32, #tpu.memory_space<vmem>>, vector<16x128xf32>
    tpu.vector_store %arg6[%c0_6, %c0_7], %7 {strides = array<i32>} : memref<16x128xf32, #tpu.memory_space<vmem>>, vector<16x128xf32>,
    return
  }
  func.func @transform_0(%arg0: i32, %arg1: i32, %arg2: i32) -> (i32, i32) {
    %c0_i32 = arith.constant 0 : i32
    return %arg0, %arg2 : i32, i32
  }
  func.func @transform_1(%arg0: i32, %arg1: i32, %arg2: i32) -> (i32, i32) {
    %c0_i32 = arith.constant 0 : i32
    return %arg2, %arg1 : i32, i32
  }
  func.func @transform_2(%arg0: i32, %arg1: i32, %arg2: i32) -> (i32, i32) {
    %c0_i32 = arith.constant 0 : i32
    %c0_i32_0 = arith.constant 0 : i32
    return %c0_i32, %arg1 : i32, i32
  }
  func.func @transform_3(%arg0: i32, %arg1: i32, %arg2: i32) -> (i32, i32) {
    %c0_i32 = arith.constant 0 : i32
    return %arg0, %arg1 : i32, i32
  }
}

</mosaic_0001>

<llo_original>
// kernel: forward.1
$region0: #{forward.1}
  #allocation0 [shape = 'u32[]', space=smem, size = 0x4, offset = 0x4, fixed_abs, tag = 'smem constant byte address 0x4 - core index']
  #allocation1 [shape = 'u32[144,128]{1,0:T(1,128)}', space=vmem, size = 0x12000, scoped, tag = 'internal scratch']
  %s0 = inlined_call_operand.vmem [shape: bf16[16,1024], index: 0, kind: input, shape index: {}]
  %s1 = inlined_call_operand.hbm [shape: bf16[1024,128], index: 1, kind: input, shape index: {}]
  %s2 = inlined_call_operand.vmem [shape: f32[1,128], index: 2, kind: input, shape index: {}]
  %s3 = inlined_call_operand.vmem [shape: f32[16,128], index: 3, kind: output, shape index: {}]
  %s4 = sld [smem:[#allocation0]]
  $region30: #{forward.1} parent=0
    _
  %s6 = ssub.s32 1, %s4
  %s7 = scalar_select 0, %s6, %s4
  $region1: #{forward.1} parent=0
    #allocation2 [shape = 'u8[262144]{0}', space=vmem, size = 0x40000, scoped, tag = 'input window, operand 1, single buffered']
    #allocation3 [shape = 's32[1]{0}', space=sflag, size = 0x4, scoped, tag = 'scoped memory for forward.1']
    %8 = vsyncpa [#allocation3], 0
    // Predicated region
    $region2: #{forward.1} parent=1 // pred_check
      _
    $region3: #{forward.1} parent=1 // pred_check_branch
      %10 = sbr.rel (0) target = $region5
    $region4: #{forward.1} parent=1 // pred_region
      _
    $region5: #{forward.1} parent=1 // pred_fallthru
      _
    // Predicated region
    $region6: #{forward.1} parent=1 // pred_check
      _
    $region7: #{forward.1} parent=1 // pred_check_branch
      %12 = sbr.rel (0) target = $region9
    $region8: #{forward.1} parent=1 // pred_region
      %s14 = ssub.s32 8192, 8192
      %15 = vsyncadd [#allocation3], %s14
      %s16 = sshll.u32 [#allocation2], 4
      %s17 = int_to_ptr.vmem [resolvable:$true] %s16
      %22 = dma.hbm_to_vmem [thread:$0]  %s1, 8192, %s17, [#allocation3], 64, 64, 4
    $region9: #{forward.1} parent=1 // pred_fallthru
      _
    // Predicated region
    $region10: #{forward.1} parent=1 // pred_check
      _
    $region11: #{forward.1} parent=1 // pred_check_branch
      %24 = sbr.rel (0) target = $region13
    $region12: #{forward.1} parent=1 // pred_region
      _
    $region13: #{forward.1} parent=1 // pred_fallthru
      _
    // Predicated region
    $region14: #{forward.1} parent=1 // pred_check
      _
    $region15: #{forward.1} parent=1 // pred_check_branch
      %26 = sbr.rel (0) target = $region17
    $region16: #{forward.1} parent=1 // pred_region
      %27 = dma.done [#allocation3], 8192
    $region17: #{forward.1} parent=1 // pred_fallthru
      _
    %p29 = scmp.eq.s32.totalorder 0, 0
    // Predicated region
    $region18: #{forward.1} parent=1 // pred_check
      %p30 = pneg %p29
    $region19: #{forward.1} parent=1 // pred_check_branch
      %32 = sbr.rel (%p30) target = $region21
    $region20: #{forward.1} parent=1 // pred_region
      %v33 = vld [vmem:[%s2] sm:$0x1]
      %v35 = vlaneseq
      %v36 = vshrl.u32 %v35, 7
      %v37 = vsub.s32 0, %v36
      %v38 = vrot.slane %v33, %v37
      %40 = vst [vmem:[%s3] sm:$0xff] %v38
      %41 = vst [vmem:[%s3 + $0x8] sm:$0xff] %v38
    $region21: #{forward.1} parent=1 // pred_fallthru
      _
    %v42 = vld [vmem:[%s3] sm:$0xff]
    %v43 = vld [vmem:[%s3 + $0x8] sm:$0xff]
    %v44 = vld [vmem:[%s0] sm:$0xff]
    %v45 = vld [vmem:[%s0 + $0x8] sm:$0xff]
    %v46 = vld [vmem:[%s0 + $0x10] sm:$0xff]
    %v47 = vld [vmem:[%s0 + $0x18] sm:$0xff]
    %v48 = vld [vmem:[%s0 + $0x20] sm:$0xff]
    %v49 = vld [vmem:[%s0 + $0x28] sm:$0xff]
    %v50 = vld [vmem:[%s0 + $0x30] sm:$0xff]
    %v51 = vld [vmem:[%s0 + $0x38] sm:$0xff]
    %v52 = vld [vmem:[#allocation2] sm:$0xf]
    %v53 = vld [vmem:[#allocation2 + $0x4] sm:$0xf]
    %v54 = vld [vmem:[#allocation2 + $0x8] sm:$0xf]
    %v55 = vld [vmem:[#allocation2 + $0xc] sm:$0xf]
    %v56 = vld [vmem:[#allocation2 + $0x10] sm:$0xf]
    %v57 = vld [vmem:[#allocation2 + $0x14] sm:$0xf]
    %v58 = vld [vmem:[#allocation2 + $0x18] sm:$0xf]
    %v59 = vld [vmem:[#allocation2 + $0x1c] sm:$0xf]
    %v60 = vld [vmem:[#allocation2 + $0x20] sm:$0xf]
    %v61 = vld [vmem:[#allocation2 + $0x24] sm:$0xf]
    %v62 = vld [vmem:[#allocation2 + $0x28] sm:$0xf]
    %v63 = vld [vmem:[#allocation2 + $0x2c] sm:$0xf]
    %v64 = vld [vmem:[#allocation2 + $0x30] sm:$0xf]
    %v65 = vld [vmem:[#allocation2 + $0x34] sm:$0xf]
    %v66 = vld [vmem:[#allocation2 + $0x38] sm:$0xf]
    %v67 = vld [vmem:[#allocation2 + $0x3c] sm:$0xf]
    %v68 = vld [vmem:[#allocation2 + $0x40] sm:$0xf]
    %v69 = vld [vmem:[#allocation2 + $0x44] sm:$0xf]
    %v70 = vld [vmem:[#allocation2 + $0x48] sm:$0xf]
    %v71 = vld [vmem:[#allocation2 + $0x4c] sm:$0xf]
    %v72 = vld [vmem:[#allocation2 + $0x50] sm:$0xf]
    %v73 = vld [vmem:[#allocation2 + $0x54] sm:$0xf]
    %v74 = vld [vmem:[#allocation2 + $0x58] sm:$0xf]
    %v75 = vld [vmem:[#allocation2 + $0x5c] sm:$0xf]
    %v76 = vld [vmem:[#allocation2 + $0x60] sm:$0xf]
    %v77 = vld [vmem:[#allocation2 + $0x64] sm:$0xf]
    %v78 = vld [vmem:[#allocation2 + $0x68] sm:$0xf]
    %v79 = vld [vmem:[#allocation2 + $0x6c] sm:$0xf]
    %v80 = vld [vmem:[#allocation2 + $0x70] sm:$0xf]
    %v81 = vld [vmem:[#allocation2 + $0x74] sm:$0xf]
    %v82 = vld [vmem:[#allocation2 + $0x78] sm:$0xf]
    %v83 = vld [vmem:[#allocation2 + $0x7c] sm:$0xf]
    %v84 = vld [vmem:[#allocation2 + $0x80] sm:$0xf]
    %v85 = vld [vmem:[#allocation2 + $0x84] sm:$0xf]
    %v86 = vld [vmem:[#allocation2 + $0x88] sm:$0xf]
    %v87 = vld [vmem:[#allocation2 + $0x8c] sm:$0xf]
    %v88 = vld [vmem:[#allocation2 + $0x90] sm:$0xf]
    %v89 = vld [vmem:[#allocation2 + $0x94] sm:$0xf]
    %v90 = vld [vmem:[#allocation2 + $0x98] sm:$0xf]
    %v91 = vld [vmem:[#allocation2 + $0x9c] sm:$0xf]
    %v92 = vld [vmem:[#allocation2 + $0xa0] sm:$0xf]
    %v93 = vld [vmem:[#allocation2 + $0xa4] sm:$0xf]
    %v94 = vld [vmem:[#allocation2 + $0xa8] sm:$0xf]
    %v95 = vld [vmem:[#allocation2 + $0xac] sm:$0xf]
    %v96 = vld [vmem:[#allocation2 + $0xb0] sm:$0xf]
    %v97 = vld [vmem:[#allocation2 + $0xb4] sm:$0xf]
    %v98 = vld [vmem:[#allocation2 + $0xb8] sm:$0xf]
    %v99 = vld [vmem:[#allocation2 + $0xbc] sm:$0xf]
    %v100 = vld [vmem:[#allocation2 + $0xc0] sm:$0xf]
    %v101 = vld [vmem:[#allocation2 + $0xc4] sm:$0xf]
    %v102 = vld [vmem:[#allocation2 + $0xc8] sm:$0xf]
    %v103 = vld [vmem:[#allocation2 + $0xcc] sm:$0xf]
    %v104 = vld [vmem:[#allocation2 + $0xd0] sm:$0xf]
    %v105 = vld [vmem:[#allocation2 + $0xd4] sm:$0xf]
    %v106 = vld [vmem:[#allocation2 + $0xd8] sm:$0xf]
    %v107 = vld [vmem:[#allocation2 + $0xdc] sm:$0xf]
    %v108 = vld [vmem:[#allocation2 + $0xe0] sm:$0xf]
    %v109 = vld [vmem:[#allocation2 + $0xe4] sm:$0xf]
    %v110 = vld [vmem:[#allocation2 + $0xe8] sm:$0xf]
    %v111 = vld [vmem:[#allocation2 + $0xec] sm:$0xf]
    %v112 = vld [vmem:[#allocation2 + $0xf0] sm:$0xf]
    %v113 = vld [vmem:[#allocation2 + $0xf4] sm:$0xf]
    %v114 = vld [vmem:[#allocation2 + $0xf8] sm:$0xf]
    %v115 = vld [vmem:[#allocation2 + $0xfc] sm:$0xf]
    %v116 = vld [vmem:[#allocation2 + $0x100] sm:$0xf]
    %v117 = vld [vmem:[#allocation2 + $0x104] sm:$0xf]
    %v118 = vld [vmem:[#allocation2 + $0x108] sm:$0xf]
    %v119 = vld [vmem:[#allocation2 + $0x10c] sm:$0xf]
    %v120 = vld [vmem:[#allocation2 + $0x110] sm:$0xf]
    %v121 = vld [vmem:[#allocation2 + $0x114] sm:$0xf]
    %v122 = vld [vmem:[#allocation2 + $0x118] sm:$0xf]
    %v123 = vld [vmem:[#allocation2 + $0x11c] sm:$0xf]
    %v124 = vld [vmem:[#allocation2 + $0x120] sm:$0xf]
    %v125 = vld [vmem:[#allocation2 + $0x124] sm:$0xf]
    %v126 = vld [vmem:[#allocation2 + $0x128] sm:$0xf]
    %v127 = vld [vmem:[#allocation2 + $0x12c] sm:$0xf]
    %v128 = vld [vmem:[#allocation2 + $0x130] sm:$0xf]
    %v129 = vld [vmem:[#allocation2 + $0x134] sm:$0xf]
    %v130 = vld [vmem:[#allocation2 + $0x138] sm:$0xf]
    %v131 = vld [vmem:[#allocation2 + $0x13c] sm:$0xf]
    %v132 = vld [vmem:[#allocation2 + $0x140] sm:$0xf]
    %v133 = vld [vmem:[#allocation2 + $0x144] sm:$0xf]
    %v134 = vld [vmem:[#allocation2 + $0x148] sm:$0xf]
    %v135 = vld [vmem:[#allocation2 + $0x14c] sm:$0xf]
    %v136 = vld [vmem:[#allocation2 + $0x150] sm:$0xf]
    %v137 = vld [vmem:[#allocation2 + $0x154] sm:$0xf]
    %v138 = vld [vmem:[#allocation2 + $0x158] sm:$0xf]
    %v139 = vld [vmem:[#allocation2 + $0x15c] sm:$0xf]
    %v140 = vld [vmem:[#allocation2 + $0x160] sm:$0xf]
    %v141 = vld [vmem:[#allocation2 + $0x164] sm:$0xf]
    %v142 = vld [vmem:[#allocation2 + $0x168] sm:$0xf]
    %v143 = vld [vmem:[#allocation2 + $0x16c] sm:$0xf]
    %v144 = vld [vmem:[#allocation2 + $0x170] sm:$0xf]
    %v145 = vld [vmem:[#allocation2 + $0x174] sm:$0xf]
    %v146 = vld [vmem:[#allocation2 + $0x178] sm:$0xf]
    %v147 = vld [vmem:[#allocation2 + $0x17c] sm:$0xf]
    %v148 = vld [vmem:[#allocation2 + $0x180] sm:$0xf]
    %v149 = vld [vmem:[#allocation2 + $0x184] sm:$0xf]
    %v150 = vld [vmem:[#allocation2 + $0x188] sm:$0xf]
    %v151 = vld [vmem:[#allocation2 + $0x18c] sm:$0xf]
    %v152 = vld [vmem:[#allocation2 + $0x190] sm:$0xf]
    %v153 = vld [vmem:[#allocation2 + $0x194] sm:$0xf]
    %v154 = vld [vmem:[#allocation2 + $0x198] sm:$0xf]
    %v155 = vld [vmem:[#allocation2 + $0x19c] sm:$0xf]
    %v156 = vld [vmem:[#allocation2 + $0x1a0] sm:$0xf]
    %v157 = vld [vmem:[#allocation2 + $0x1a4] sm:$0xf]
    %v158 = vld [vmem:[#allocation2 + $0x1a8] sm:$0xf]
    %v159 = vld [vmem:[#allocation2 + $0x1ac] sm:$0xf]
    %v160 = vld [vmem:[#allocation2 + $0x1b0] sm:$0xf]
    %v161 = vld [vmem:[#allocation2 + $0x1b4] sm:$0xf]
    %v162 = vld [vmem:[#allocation2 + $0x1b8] sm:$0xf]
    %v163 = vld [vmem:[#allocation2 + $0x1bc] sm:$0xf]
    %v164 = vld [vmem:[#allocation2 + $0x1c0] sm:$0xf]
    %v165 = vld [vmem:[#allocation2 + $0x1c4] sm:$0xf]
    %v166 = vld [vmem:[#allocation2 + $0x1c8] sm:$0xf]
    %v167 = vld [vmem:[#allocation2 + $0x1cc] sm:$0xf]
    %v168 = vld [vmem:[#allocation2 + $0x1d0] sm:$0xf]
    %v169 = vld [vmem:[#allocation2 + $0x1d4] sm:$0xf]
    %v170 = vld [vmem:[#allocation2 + $0x1d8] sm:$0xf]
    %v171 = vld [vmem:[#allocation2 + $0x1dc] sm:$0xf]
    %v172 = vld [vmem:[#allocation2 + $0x1e0] sm:$0xf]
    %v173 = vld [vmem:[#allocation2 + $0x1e4] sm:$0xf]
    %v174 = vld [vmem:[#allocation2 + $0x1e8] sm:$0xf]
    %v175 = vld [vmem:[#allocation2 + $0x1ec] sm:$0xf]
    %v176 = vld [vmem:[#allocation2 + $0x1f0] sm:$0xf]
    %v177 = vld [vmem:[#allocation2 + $0x1f4] sm:$0xf]
    %v178 = vld [vmem:[#allocation2 + $0x1f8] sm:$0xf]
    %v179 = vld [vmem:[#allocation2 + $0x1fc] sm:$0xf]
    %v188 = vunpack.c.l.b16 %v44
    %v189 = vunpack.c.h.b16 %v44
    %v190 = vunpack.c.l.b16 %v45
    %v191 = vunpack.c.h.b16 %v45
    %v192 = vunpack.c.l.b16 %v46
    %v193 = vunpack.c.h.b16 %v46
    %v194 = vunpack.c.l.b16 %v47
    %v195 = vunpack.c.h.b16 %v47
    %v196 = vunpack.c.l.b16 %v48
    %v197 = vunpack.c.h.b16 %v48
    %v198 = vunpack.c.l.b16 %v49
    %v199 = vunpack.c.h.b16 %v49
    %v200 = vunpack.c.l.b16 %v50
    %v201 = vunpack.c.h.b16 %v50
    %v202 = vunpack.c.l.b16 %v51
    %v203 = vunpack.c.h.b16 %v51
    %v204 = vpack.c.b16 %v196, %v188
    %v205 = vpack.c.b16 %v197, %v189
    %v206 = vpack.c.b16 %v198, %v190
    %v207 = vpack.c.b16 %v199, %v191
    %v208 = vpack.c.b16 %v200, %v192
    %v209 = vpack.c.b16 %v201, %v193
    %v210 = vpack.c.b16 %v202, %v194
    %v211 = vpack.c.b16 %v203, %v195
    %v348 = vunpack.c.l.b16 %v52
    %v349 = vunpack.c.l.b16 %v53
    %v350 = vunpack.c.l.b16 %v54
    %v351 = vunpack.c.l.b16 %v55
    %v352 = vunpack.c.l.b16 %v56
    %v353 = vunpack.c.l.b16 %v57
    %v354 = vunpack.c.l.b16 %v58
    %v355 = vunpack.c.l.b16 %v59
    %v356 = vunpack.c.l.b16 %v60
    %v357 = vunpack.c.l.b16 %v61
    %v358 = vunpack.c.l.b16 %v62
    %v359 = vunpack.c.l.b16 %v63
    %v360 = vunpack.c.l.b16 %v64
    %v361 = vunpack.c.l.b16 %v65
    %v362 = vunpack.c.l.b16 %v66
    %v363 = vunpack.c.l.b16 %v67
    %v364 = vunpack.c.l.b16 %v68
    %v365 = vunpack.c.l.b16 %v69
    %v366 = vunpack.c.l.b16 %v70
    %v367 = vunpack.c.l.b16 %v71
    %v368 = vunpack.c.l.b16 %v72
    %v369 = vunpack.c.l.b16 %v73
    %v370 = vunpack.c.l.b16 %v74
    %v371 = vunpack.c.l.b16 %v75
    %v372 = vunpack.c.l.b16 %v76
    %v373 = vunpack.c.l.b16 %v77
    %v374 = vunpack.c.l.b16 %v78
    %v375 = vunpack.c.l.b16 %v79
    %v376 = vunpack.c.l.b16 %v80
    %v377 = vunpack.c.l.b16 %v81
    %v378 = vunpack.c.l.b16 %v82
    %v379 = vunpack.c.l.b16 %v83
    %v380 = vunpack.c.l.b16 %v84
    %v381 = vunpack.c.l.b16 %v85
    %v382 = vunpack.c.l.b16 %v86
    %v383 = vunpack.c.l.b16 %v87
    %v384 = vunpack.c.l.b16 %v88
    %v385 = vunpack.c.l.b16 %v89
    %v386 = vunpack.c.l.b16 %v90
    %v387 = vunpack.c.l.b16 %v91
    %v388 = vunpack.c.l.b16 %v92
    %v389 = vunpack.c.l.b16 %v93
    %v390 = vunpack.c.l.b16 %v94
    %v391 = vunpack.c.l.b16 %v95
    %v392 = vunpack.c.l.b16 %v96
    %v393 = vunpack.c.l.b16 %v97
    %v394 = vunpack.c.l.b16 %v98
    %v395 = vunpack.c.l.b16 %v99
    %v396 = vunpack.c.l.b16 %v100
    %v397 = vunpack.c.l.b16 %v101
    %v398 = vunpack.c.l.b16 %v102
    %v399 = vunpack.c.l.b16 %v103
    %v400 = vunpack.c.l.b16 %v104
    %v401 = vunpack.c.l.b16 %v105
    %v402 = vunpack.c.l.b16 %v106
    %v403 = vunpack.c.l.b16 %v107
    %v404 = vunpack.c.l.b16 %v108
    %v405 = vunpack.c.l.b16 %v109
    %v406 = vunpack.c.l.b16 %v110
    %v407 = vunpack.c.l.b16 %v111
    %v408 = vunpack.c.l.b16 %v112
    %v409 = vunpack.c.l.b16 %v113
    %v410 = vunpack.c.l.b16 %v114
    %v411 = vunpack.c.l.b16 %v115
    %v412 = vunpack.c.l.b16 %v116
    %v413 = vunpack.c.l.b16 %v117
    %v414 = vunpack.c.l.b16 %v118
    %v415 = vunpack.c.l.b16 %v119
    %v416 = vunpack.c.l.b16 %v120
    %v417 = vunpack.c.l.b16 %v121
    %v418 = vunpack.c.l.b16 %v122
    %v419 = vunpack.c.l.b16 %v123
    %v420 = vunpack.c.l.b16 %v124
    %v421 = vunpack.c.l.b16 %v125
    %v422 = vunpack.c.l.b16 %v126
    %v423 = vunpack.c.l.b16 %v127
    %v424 = vunpack.c.l.b16 %v128
    %v425 = vunpack.c.l.b16 %v129
    %v426 = vunpack.c.l.b16 %v130
    %v427 = vunpack.c.l.b16 %v131
    %v428 = vunpack.c.l.b16 %v132
    %v429 = vunpack.c.l.b16 %v133
    %v430 = vunpack.c.l.b16 %v134
    %v431 = vunpack.c.l.b16 %v135
    %v432 = vunpack.c.l.b16 %v136
    %v433 = vunpack.c.l.b16 %v137
    %v434 = vunpack.c.l.b16 %v138
    %v435 = vunpack.c.l.b16 %v139
    %v436 = vunpack.c.l.b16 %v140
    %v437 = vunpack.c.l.b16 %v141
    %v438 = vunpack.c.l.b16 %v142
    %v439 = vunpack.c.l.b16 %v143
    %v440 = vunpack.c.l.b16 %v144
    %v441 = vunpack.c.l.b16 %v145
    %v442 = vunpack.c.l.b16 %v146
    %v443 = vunpack.c.l.b16 %v147
    %v444 = vunpack.c.l.b16 %v148
    %v445 = vunpack.c.l.b16 %v149
    %v446 = vunpack.c.l.b16 %v150
    %v447 = vunpack.c.l.b16 %v151
    %v448 = vunpack.c.l.b16 %v152
    %v449 = vunpack.c.l.b16 %v153
    %v450 = vunpack.c.l.b16 %v154
    %v451 = vunpack.c.l.b16 %v155
    %v452 = vunpack.c.l.b16 %v156
    %v453 = vunpack.c.l.b16 %v157
    %v454 = vunpack.c.l.b16 %v158
    %v455 = vunpack.c.l.b16 %v159
    %v456 = vunpack.c.l.b16 %v160
    %v457 = vunpack.c.l.b16 %v161
    %v458 = vunpack.c.l.b16 %v162
    %v459 = vunpack.c.l.b16 %v163
    %v460 = vunpack.c.l.b16 %v164
    %v461 = vunpack.c.l.b16 %v165
    %v462 = vunpack.c.l.b16 %v166
    %v463 = vunpack.c.l.b16 %v167
    %v464 = vunpack.c.l.b16 %v168
    %v465 = vunpack.c.l.b16 %v169
    %v466 = vunpack.c.l.b16 %v170
    %v467 = vunpack.c.l.b16 %v171
    %v468 = vunpack.c.l.b16 %v172
    %v469 = vunpack.c.l.b16 %v173
    %v470 = vunpack.c.l.b16 %v174
    %v471 = vunpack.c.l.b16 %v175
    %v472 = vunpack.c.l.b16 %v176
    %v473 = vunpack.c.l.b16 %v177
    %v474 = vunpack.c.l.b16 %v178
    %v475 = vunpack.c.l.b16 %v179
    %v476 = vpack.c.b16 %v349, %v348
    %v477 = vpack.c.b16 %v351, %v350
    %v478 = vpack.c.b16 %v353, %v352
    %v479 = vpack.c.b16 %v355, %v354
    %v480 = vpack.c.b16 %v357, %v356
    %v481 = vpack.c.b16 %v359, %v358
    %v482 = vpack.c.b16 %v361, %v360
    %v483 = vpack.c.b16 %v363, %v362
    %v484 = vpack.c.b16 %v365, %v364
    %v485 = vpack.c.b16 %v367, %v366
    %v486 = vpack.c.b16 %v369, %v368
    %v487 = vpack.c.b16 %v371, %v370
    %v488 = vpack.c.b16 %v373, %v372
    %v489 = vpack.c.b16 %v375, %v374
    %v490 = vpack.c.b16 %v377, %v376
    %v491 = vpack.c.b16 %v379, %v378
    %v492 = vpack.c.b16 %v381, %v380
    %v493 = vpack.c.b16 %v383, %v382
    %v494 = vpack.c.b16 %v385, %v384
    %v495 = vpack.c.b16 %v387, %v386
    %v496 = vpack.c.b16 %v389, %v388
    %v497 = vpack.c.b16 %v391, %v390
    %v498 = vpack.c.b16 %v393, %v392
    %v499 = vpack.c.b16 %v395, %v394
    %v500 = vpack.c.b16 %v397, %v396
    %v501 = vpack.c.b16 %v399, %v398
    %v502 = vpack.c.b16 %v401, %v400
    %v503 = vpack.c.b16 %v403, %v402
    %v504 = vpack.c.b16 %v405, %v404
    %v505 = vpack.c.b16 %v407, %v406
    %v506 = vpack.c.b16 %v409, %v408
    %v507 = vpack.c.b16 %v411, %v410
    %v508 = vpack.c.b16 %v413, %v412
    %v509 = vpack.c.b16 %v415, %v414
    %v510 = vpack.c.b16 %v417, %v416
    %v511 = vpack.c.b16 %v419, %v418
    %v512 = vpack.c.b16 %v421, %v420
    %v513 = vpack.c.b16 %v423, %v422
    %v514 = vpack.c.b16 %v425, %v424
    %v515 = vpack.c.b16 %v427, %v426
    %v516 = vpack.c.b16 %v429, %v428
    %v517 = vpack.c.b16 %v431, %v430
    %v518 = vpack.c.b16 %v433, %v432
    %v519 = vpack.c.b16 %v435, %v434
    %v520 = vpack.c.b16 %v437, %v436
    %v521 = vpack.c.b16 %v439, %v438
    %v522 = vpack.c.b16 %v441, %v440
    %v523 = vpack.c.b16 %v443, %v442
    %v524 = vpack.c.b16 %v445, %v444
    %v525 = vpack.c.b16 %v447, %v446
    %v526 = vpack.c.b16 %v449, %v448
    %v527 = vpack.c.b16 %v451, %v450
    %v528 = vpack.c.b16 %v453, %v452
    %v529 = vpack.c.b16 %v455, %v454
    %v530 = vpack.c.b16 %v457, %v456
    %v531 = vpack.c.b16 %v459, %v458
    %v532 = vpack.c.b16 %v461, %v460
    %v533 = vpack.c.b16 %v463, %v462
    %v534 = vpack.c.b16 %v465, %v464
    %v535 = vpack.c.b16 %v467, %v466
    %v536 = vpack.c.b16 %v469, %v468
    %v537 = vpack.c.b16 %v471, %v470
    %v538 = vpack.c.b16 %v473, %v472
    %v539 = vpack.c.b16 %v475, %v474
    %604 = vmatprep.subr.bf16.mxu0 0
    %605 = vmatpush1.bf16.msra.mxu0 %v476
    %606 = vmatprep.subr.bf16.mxu0 0
    %607 = vmatpush1.bf16.msra.mxu0 %v477
    %608 = vmatprep.subr.bf16.mxu0 0
    %609 = vmatpush1.bf16.msra.mxu0 %v478
    %610 = vmatprep.subr.bf16.mxu0 0
    %611 = vmatpush1.bf16.msra.mxu0 %v479
    %612 = vmatprep.subr.bf16.mxu0 0
    %613 = vmatpush1.bf16.msra.mxu0 %v480
    %614 = vmatprep.subr.bf16.mxu0 0
    %615 = vmatpush1.bf16.msra.mxu0 %v481
    %616 = vmatprep.subr.bf16.mxu0 0
    %617 = vmatpush1.bf16.msra.mxu0 %v482
    %618 = vmatprep.subr.bf16.mxu0 0
    %619 = vmatpush1.bf16.msra.mxu0 %v483
    %620 = vmatprep.subr.bf16.mxu0 0
    %621 = vmatpush1.bf16.msra.mxu0 %v484
    %622 = vmatprep.subr.bf16.mxu0 0
    %623 = vmatpush1.bf16.msra.mxu0 %v485
    %624 = vmatprep.subr.bf16.mxu0 0
    %625 = vmatpush1.bf16.msra.mxu0 %v486
    %626 = vmatprep.subr.bf16.mxu0 0
    %627 = vmatpush1.bf16.msra.mxu0 %v487
    %628 = vmatprep.subr.bf16.mxu0 0
    %629 = vmatpush1.bf16.msra.mxu0 %v488
    %630 = vmatprep.subr.bf16.mxu0 0
    %631 = vmatpush1.bf16.msra.mxu0 %v489
    %632 = vmatprep.subr.bf16.mxu0 0
    %633 = vmatpush1.bf16.msra.mxu0 %v490
    %634 = vmatprep.subr.bf16.mxu0 0
    %635 = vmatpush1.bf16.msra.mxu0 %v491
    %636 = vmatprep.mubr.bf16.mxu0 %v205
    %637 = vmatmul.mubr.bf16.gmra.mrb[0].mxu0 %v204
    %v638 = vpop.f32.mrb[0].mxu0
    %v639 = vadd.f32 0.0, %v638
    %v640 = vpop.f32.mrb[0].mxu0
    %v641 = vpop.f32.mrb[0].mxu0
    %v642 = vadd.f32 0.0, %v641
    %v643 = vpop.f32.mrb[0].mxu0
    %644 = vdwg.mxu0
    %645 = vmatprep.subr.bf16.mxu0 0
    %646 = vmatpush1.bf16.msra.mxu0 %v492
    %647 = vmatprep.subr.bf16.mxu0 0
    %648 = vmatpush1.bf16.msra.mxu0 %v493
    %649 = vmatprep.subr.bf16.mxu0 0
    %650 = vmatpush1.bf16.msra.mxu0 %v494
    %651 = vmatprep.subr.bf16.mxu0 0
    %652 = vmatpush1.bf16.msra.mxu0 %v495
    %653 = vmatprep.subr.bf16.mxu0 0
    %654 = vmatpush1.bf16.msra.mxu0 %v496
    %655 = vmatprep.subr.bf16.mxu0 0
    %656 = vmatpush1.bf16.msra.mxu0 %v497
    %657 = vmatprep.subr.bf16.mxu0 0
    %658 = vmatpush1.bf16.msra.mxu0 %v498
    %659 = vmatprep.subr.bf16.mxu0 0
    %660 = vmatpush1.bf16.msra.mxu0 %v499
    %661 = vmatprep.subr.bf16.mxu0 0
    %662 = vmatpush1.bf16.msra.mxu0 %v500
    %663 = vmatprep.subr.bf16.mxu0 0
    %664 = vmatpush1.bf16.msra.mxu0 %v501
    %665 = vmatprep.subr.bf16.mxu0 0
    %666 = vmatpush1.bf16.msra.mxu0 %v502
    %667 = vmatprep.subr.bf16.mxu0 0
    %668 = vmatpush1.bf16.msra.mxu0 %v503
    %669 = vmatprep.subr.bf16.mxu0 0
    %670 = vmatpush1.bf16.msra.mxu0 %v504
    %671 = vmatprep.subr.bf16.mxu0 0
    %672 = vmatpush1.bf16.msra.mxu0 %v505
    %673 = vmatprep.subr.bf16.mxu0 0
    %674 = vmatpush1.bf16.msra.mxu0 %v506
    %675 = vmatprep.subr.bf16.mxu0 0
    %676 = vmatpush1.bf16.msra.mxu0 %v507
    %677 = vmatprep.mubr.bf16.mxu0 %v207
    %678 = vmatmul.mubr.bf16.gmra.mrb[0].mxu0 %v206
    %v679 = vpop.f32.mrb[0].mxu0
    %v680 = vadd.f32 %v639, %v679
    %v681 = vpop.f32.mrb[0].mxu0
    %v682 = vpop.f32.mrb[0].mxu0
    %v683 = vadd.f32 %v642, %v682
    %v684 = vpop.f32.mrb[0].mxu0
    %685 = vdwg.mxu0
    %686 = vmatprep.subr.bf16.mxu0 0
    %687 = vmatpush1.bf16.msra.mxu0 %v508
    %688 = vmatprep.subr.bf16.mxu0 0
    %689 = vmatpush1.bf16.msra.mxu0 %v509
    %690 = vmatprep.subr.bf16.mxu0 0
    %691 = vmatpush1.bf16.msra.mxu0 %v510
    %692 = vmatprep.subr.bf16.mxu0 0
    %693 = vmatpush1.bf16.msra.mxu0 %v511
    %694 = vmatprep.subr.bf16.mxu0 0
    %695 = vmatpush1.bf16.msra.mxu0 %v512
    %696 = vmatprep.subr.bf16.mxu0 0
    %697 = vmatpush1.bf16.msra.mxu0 %v513
    %698 = vmatprep.subr.bf16.mxu0 0
    %699 = vmatpush1.bf16.msra.mxu0 %v514
    %700 = vmatprep.subr.bf16.mxu0 0
    %701 = vmatpush1.bf16.msra.mxu0 %v515
    %702 = vmatprep.subr.bf16.mxu0 0
    %703 = vmatpush1.bf16.msra.mxu0 %v516
    %704 = vmatprep.subr.bf16.mxu0 0
    %705 = vmatpush1.bf16.msra.mxu0 %v517
    %706 = vmatprep.subr.bf16.mxu0 0
    %707 = vmatpush1.bf16.msra.mxu0 %v518
    %708 = vmatprep.subr.bf16.mxu0 0
    %709 = vmatpush1.bf16.msra.mxu0 %v519
    %710 = vmatprep.subr.bf16.mxu0 0
    %711 = vmatpush1.bf16.msra.mxu0 %v520
    %712 = vmatprep.subr.bf16.mxu0 0
    %713 = vmatpush1.bf16.msra.mxu0 %v521
    %714 = vmatprep.subr.bf16.mxu0 0
    %715 = vmatpush1.bf16.msra.mxu0 %v522
    %716 = vmatprep.subr.bf16.mxu0 0
    %717 = vmatpush1.bf16.msra.mxu0 %v523
    %718 = vmatprep.mubr.bf16.mxu0 %v209
    %719 = vmatmul.mubr.bf16.gmra.mrb[0].mxu0 %v208
    %v720 = vpop.f32.mrb[0].mxu0
    %v721 = vadd.f32 %v680, %v720
    %v722 = vpop.f32.mrb[0].mxu0
    %v723 = vpop.f32.mrb[0].mxu0
    %v724 = vadd.f32 %v683, %v723
    %v725 = vpop.f32.mrb[0].mxu0
    %726 = vdwg.mxu0
    %727 = vmatprep.subr.bf16.mxu0 0
    %728 = vmatpush1.bf16.msra.mxu0 %v524
    %729 = vmatprep.subr.bf16.mxu0 0
    %730 = vmatpush1.bf16.msra.mxu0 %v525
    %731 = vmatprep.subr.bf16.mxu0 0
    %732 = vmatpush1.bf16.msra.mxu0 %v526
    %733 = vmatprep.subr.bf16.mxu0 0
    %734 = vmatpush1.bf16.msra.mxu0 %v527
    %735 = vmatprep.subr.bf16.mxu0 0
    %736 = vmatpush1.bf16.msra.mxu0 %v528
    %737 = vmatprep.subr.bf16.mxu0 0
    %738 = vmatpush1.bf16.msra.mxu0 %v529
    %739 = vmatprep.subr.bf16.mxu0 0
    %740 = vmatpush1.bf16.msra.mxu0 %v530
    %741 = vmatprep.subr.bf16.mxu0 0
    %742 = vmatpush1.bf16.msra.mxu0 %v531
    %743 = vmatprep.subr.bf16.mxu0 0
    %744 = vmatpush1.bf16.msra.mxu0 %v532
    %745 = vmatprep.subr.bf16.mxu0 0
    %746 = vmatpush1.bf16.msra.mxu0 %v533
    %747 = vmatprep.subr.bf16.mxu0 0
    %748 = vmatpush1.bf16.msra.mxu0 %v534
    %749 = vmatprep.subr.bf16.mxu0 0
    %750 = vmatpush1.bf16.msra.mxu0 %v535
    %751 = vmatprep.subr.bf16.mxu0 0
    %752 = vmatpush1.bf16.msra.mxu0 %v536
    %753 = vmatprep.subr.bf16.mxu0 0
    %754 = vmatpush1.bf16.msra.mxu0 %v537
    %755 = vmatprep.subr.bf16.mxu0 0
    %756 = vmatpush1.bf16.msra.mxu0 %v538
    %757 = vmatprep.subr.bf16.mxu0 0
    %758 = vmatpush1.bf16.msra.mxu0 %v539
    %759 = vmatprep.mubr.bf16.mxu0 %v211
    %760 = vmatmul.mubr.bf16.gmra.mrb[0].mxu0 %v210
    %v761 = vpop.f32.mrb[0].mxu0
    %v762 = vadd.f32 %v721, %v761
    %v763 = vpop.f32.mrb[0].mxu0
    %v764 = vpop.f32.mrb[0].mxu0
    %v765 = vadd.f32 %v724, %v764
    %v766 = vpop.f32.mrb[0].mxu0
    %767 = vdwg.mxu0
    %v768 = vadd.f32 %v42, %v762
    %v769 = vadd.f32 %v43, %v765
    %770 = vst [vmem:[%s3] sm:$0xff] %v768
    %771 = vst [vmem:[%s3 + $0x8] sm:$0xff] %v769
    // Predicated region
    $region22: #{forward.1} parent=1 // pred_check
      _
    $region23: #{forward.1} parent=1 // pred_check_branch
      %773 = sbr.rel (0) target = $region25
    $region24: #{forward.1} parent=1 // pred_region
      _
    $region25: #{forward.1} parent=1 // pred_fallthru
      _
    // Predicated region
    $region26: #{forward.1} parent=1 // pred_check
      _
    $region27: #{forward.1} parent=1 // pred_check_branch
      %775 = sbr.rel (0) target = $region29
    $region28: #{forward.1} parent=1 // pred_region
      _
    $region29: #{forward.1} parent=1 // pred_fallthru
      _
    %776 = vsyncpa [#allocation3], 1

</llo_original>
